<compile_context>
chip_gen: v7x
topology: tpu7x:2x2x1
jax: 0.10.0
libtpu: 0.0.40
codegen_flags: <defaults>
</compile_context>

<pallas_src>
import functools

import jax
import jax.numpy as jnp
from jax.experimental import pallas as pl
from jax.experimental.pallas import tpu as pltpu


def _round_up(x: int, m: int) -> int:
    return (x + m - 1) // m * m


def _choose_tile(dim: int, granule: int, max_tile: int):
    """Pad `dim` only to the granule, then pick the largest tile that is a
    multiple of `granule`, divides the padded dim, and is <= max_tile."""
    p = _round_up(dim, granule)
    q = p // granule
    max_d = max(1, max_tile // granule)
    d = 1
    for cand in range(min(q, max_d), 0, -1):
        if q % cand == 0:
            d = cand
            break
    return p, granule * d


# ---------------------------------------------------------------------------
# Kernels
# ---------------------------------------------------------------------------

def _linear_relu_resident_kernel(x_ref, w_ref, b_ref, o_ref):
    # x_ref: (tm, Fp)  activations tile
    # w_ref: (Fp, Hp)  full weight, VMEM-resident (constant block index)
    # b_ref: (1,  Hp)  full bias
    # o_ref: (tm, Hp)  output tile — written exactly once
    y = jnp.dot(x_ref[...], w_ref[...], preferred_element_type=jnp.float32)
    y = y + b_ref[...]
    o_ref[...] = jnp.maximum(y, 0.0).astype(o_ref.dtype)


def _linear_relu_tiled_kernel(x_ref, w_ref, b_ref, o_ref, acc_ref):
    # x_ref: (tm, tk), w_ref: (tk, tn) canonical layout, b_ref: (1, tn)
    # acc_ref: (tm, tn) f32 accumulator, resident across the K axis (last).
    k = pl.program_id(2)

    @pl.when(k == 0)
    def _():
        acc_ref[...] = jnp.zeros_like(acc_ref)

    acc_ref[...] += jnp.dot(x_ref[...], w_ref[...],
                            preferred_element_type=jnp.float32)

    @pl.when(k == pl.num_programs(2) - 1)
    def _():
        y = acc_ref[...] + b_ref[...]     # bias added once, at finalize
        o_ref[...] = jnp.maximum(y, 0.0).astype(o_ref.dtype)


# ---------------------------------------------------------------------------
# Parameter setup (one-time) + apply (per call)
# ---------------------------------------------------------------------------

def init_mlp_extractor(weight, bias, *, resident_weight_bytes=4 << 20):
    """One-time parameter preparation (hoisted out of the per-call path).

    weight: (H, F) float32   torch.nn.Linear layout
    bias:   (H,)   float32
    Returns a params dict with the weight pre-transposed to canonical (Fp, Hp)
    and zero-padded to lane/contraction granules.
    """
    H, F = weight.shape
    assert bias.shape == (H,)
    Fp = _round_up(F, 128)
    Hp = _round_up(H, 128)
    w_pad = jnp.pad(weight.astype(jnp.float32), ((0, Hp - H), (0, Fp - F)))
    w_t = jnp.asarray(w_pad.T)                     # (Fp, Hp), canonical for MXU
    b2 = jnp.pad(bias.astype(jnp.float32), (0, Hp - H)).reshape(1, Hp)
    resident = (Fp * Hp * 4) <= resident_weight_bytes
    return {"w_t": w_t, "b2": b2, "F": F, "H": H, "Fp": Fp, "Hp": Hp,
            "resident": resident}


def mlp_extractor_apply(params, feat, *,
                        tm_max=512, tn_max=512, tk_max=512,
                        force_tiled=False):
    """out = relu(feat @ weight.T + bias), feat: (B, F) float32."""
    B, F = feat.shape
    assert F == params["F"], (F, params["F"])
    Fp, Hp, H = params["Fp"], params["Hp"], params["H"]
    w_t, b2 = params["w_t"], params["b2"]

    Bp = _round_up(B, 8)
    x = feat
    if (Bp, Fp) != (B, F):
        # Zero padding on F contributes 0 to the contraction; padded B rows
        # are sliced off below.
        x = jnp.pad(feat, ((0, Bp - B), (0, Fp - F)))

    if params["resident"] and not force_tiled:
        # ---- weight-resident path: 1-D grid over batch tiles only ----------
        # Budget tm so double-buffered feat/out blocks stay modest even for
        # wide layers (keeps total VMEM well under v7x's 64 MiB per core).
        feat_out_budget = 12 << 20
        tm_budget = max(8, (feat_out_budget // (8 * (Fp + Hp))) // 8 * 8)
        tm_cap = min(tm_max, tm_budget)
        if Bp >= 16:
            # keep >= 2 batch blocks so v7x can shard the parallel axis
            tm_cap = min(tm_cap, Bp // 2)
        _, tm = _choose_tile(B, 8, max(8, tm_cap))
        grid = (Bp // tm,)

        needed = 2 * (tm * Fp + Fp * Hp + tm * Hp + Hp) * 4
        vmem_limit = int(min(64 << 20, max(needed + (4 << 20), 32 << 20)))

        out = pl.pallas_call(
            _linear_relu_resident_kernel,
            out_shape=jax.ShapeDtypeStruct((Bp, Hp), feat.dtype),
            grid_spec=pltpu.PrefetchScalarGridSpec(
                num_scalar_prefetch=0,
                grid=grid,
                in_specs=[
                    pl.BlockSpec((tm, Fp), lambda i: (i, 0)),   # feat tile
                    pl.BlockSpec((Fp, Hp), lambda i: (0, 0)),   # weight (resident)
                    pl.BlockSpec((1, Hp), lambda i: (0, 0)),    # bias (resident)
                ],
                out_specs=pl.BlockSpec((tm, Hp), lambda i: (i, 0)),
            ),
            compiler_params=pltpu.CompilerParams(
                dimension_semantics=("parallel",),
                vmem_limit_bytes=vmem_limit,
            ),
            cost_estimate=pl.CostEstimate(
                flops=2 * Bp * Fp * Hp,
                transcendentals=0,
                bytes_accessed=4 * (Bp * Fp + Fp * Hp + Bp * Hp + Hp),
            ),
        )(x, w_t, b2)
    else:
        # ---- tiled fallback: (M, N, K) grid, K last, f32 accumulator -------
        _, tn = _choose_tile(H, 128, tn_max)
        _, tk = _choose_tile(F, 128, tk_max)
        tm_cap = tm_max
        if Bp >= 16 and Hp // tn < 2:
            tm_cap = min(tm_cap, Bp // 2)   # keep a parallel axis >= 2 blocks
        _, tm = _choose_tile(B, 8, max(8, tm_cap))
        grid = (Bp // tm, Hp // tn, Fp // tk)

        needed = (2 * (tm * tk + tk * tn + tm * tn + tn) + tm * tn) * 4
        vmem_limit = int(min(64 << 20, max(needed + (4 << 20), 32 << 20)))

        out = pl.pallas_call(
            _linear_relu_tiled_kernel,
            out_shape=jax.ShapeDtypeStruct((Bp, Hp), feat.dtype),
            grid_spec=pltpu.PrefetchScalarGridSpec(
                num_scalar_prefetch=0,
                grid=grid,
                in_specs=[
                    pl.BlockSpec((tm, tk), lambda i, j, k: (i, k)),   # feat
                    pl.BlockSpec((tk, tn), lambda i, j, k: (k, j)),   # weight.T
                    pl.BlockSpec((1, tn), lambda i, j, k: (0, j)),    # bias
                ],
                out_specs=pl.BlockSpec((tm, tn), lambda i, j, k: (i, j)),
                scratch_shapes=[pltpu.VMEM((tm, tn), jnp.float32)],
            ),
            compiler_params=pltpu.CompilerParams(
                dimension_semantics=("parallel", "parallel", "arbitrary"),
                vmem_limit_bytes=vmem_limit,
            ),
            cost_estimate=pl.CostEstimate(
                flops=2 * Bp * Fp * Hp,
                transcendentals=0,
                bytes_accessed=4 * ((Hp // tn) * Bp * Fp          # feat re-reads
                                    + (Bp // tm) * Fp * Hp        # weight re-reads
                                    + Bp * Hp + Hp),
            ),
        )(x, w_t, b2)

    if (Bp, Hp) != (B, H):
        out = out[:B, :H]
    return out


def mlp_extractor(feat, weight, bias, **kwargs):
    """Convenience one-shot wrapper (prefer init_mlp_extractor + apply when the
    parameters are reused across calls)."""
    return mlp_extractor_apply(init_mlp_extractor(weight, bias), feat, **kwargs)


# ---------------------------------------------------------------------------

if __name__ == "__main__":
    # Small shapes consistent with the module (CartPole-ish extractor).
    B, FEAT, HIDDEN = 8, 32, 32

    key = jax.random.PRNGKey(0)
    k_x, k_w, k_b = jax.random.split(key, 3)

    feat = jax.random.normal(k_x, (B, FEAT), dtype=jnp.float32)
    weight = jax.random.normal(k_w, (HIDDEN, FEAT), dtype=jnp.float32) * 0.1
    bias = jax.random.normal(k_b, (HIDDEN,), dtype=jnp.float32) * 0.1

    # One-time parameter prep (pad + transpose hoisted out of the call path).
    params = init_mlp_extractor(weight, bias)
    fwd = jax.jit(functools.partial(mlp_extractor_apply, params))

    out = jax.block_until_ready(fwd(feat))
    ref = jnp.maximum(feat @ weight.T + bias, 0.0)
    assert out.shape == (B, HIDDEN)
    assert jnp.allclose(out, ref, atol=1e-5, rtol=1e-5)

    # Also exercise the tiled (M, N, K) fallback path with non-trivial tiling
    # (H=640 now pads to 640 with tn=128, not 768).
    B2, F2, H2 = 256, 384, 640
    kx2, kw2, kb2 = jax.random.split(jax.random.PRNGKey(1), 3)
    feat2 = jax.random.normal(kx2, (B2, F2), dtype=jnp.float32)
    weight2 = jax.random.normal(kw2, (H2, F2), dtype=jnp.float32) * 0.05
    bias2 = jax.random.normal(kb2, (H2,), dtype=jnp.float32) * 0.05
    params2 = init_mlp_extractor(weight2, bias2)
    out2 = jax.block_until_ready(
        mlp_extractor_apply(params2, feat2, force_tiled=True))
    ref2 = jnp.maximum(feat2 @ weight2.T + bias2, 0.0)
    assert out2.shape == (B2, H2)
    assert jnp.allclose(out2, ref2, atol=1e-3, rtol=1e-3)

    # And the resident path at the same larger shapes (weight fits in VMEM).
    out3 = jax.block_until_ready(mlp_extractor_apply(params2, feat2))
    assert jnp.allclose(out3, ref2, atol=1e-3, rtol=1e-3)

    print("KERNEL_OK")
</pallas_src>

<mosaic_0001>
module attributes {stable_mosaic.version = 11 : i64} {
  func.func @_linear_relu_resident_kernel(%arg0: i32, %arg1: memref<8x128xf32, #tpu.memory_space<vmem>>, %arg2: memref<128x128xf32, #tpu.memory_space<vmem>>, %arg3: memref<1x128xf32, #tpu.memory_space<vmem>>, %arg4: memref<8x128xf32, #tpu.memory_space<vmem>>) attributes {dimension_semantics = [#tpu.dimension_semantics<parallel>], iteration_bounds = array<i64: 1>, scalar_prefetch = 0 : i64, scratch_operands = 0 : i64, tpu.core_type = #tpu.core_type<tc>, window_params = [{transform_indices = @transform_0, window_bounds = array<i64: 8, 128>}, {pipeline_mode = #tpu.pipeline_mode<synchronous>, transform_indices = @transform_1, window_bounds = array<i64: 128, 128>}, {pipeline_mode = #tpu.pipeline_mode<synchronous>, transform_indices = @transform_2, window_bounds = array<i64: 1, 128>}, {transform_indices = @transform_3, window_bounds = array<i64: 8, 128>}]} {
    %c0 = arith.constant 0 : index
    %c0_0 = arith.constant 0 : index
    %0 = vector.load %arg1[%c0, %c0_0] : memref<8x128xf32, #tpu.memory_space<vmem>>, vector<8x128xf32>
    %c0_1 = arith.constant 0 : index
    %c0_2 = arith.constant 0 : index
    %1 = vector.load %arg2[%c0_1, %c0_2] : memref<128x128xf32, #tpu.memory_space<vmem>>, vector<128x128xf32>
    %cst = arith.constant dense<0.000000e+00> : vector<8x128xf32>
    %2 = tpu.matmul %0, %1, %cst {dimension_numbers = #tpu.dot_dimension_numbers<[1], [0], [0], [1], [0, 0, 1, 1], [], []>} : vector<8x128xf32>, vector<128x128xf32>, vector<8x128xf32> -> vector<8x128xf32>
    %c0_3 = arith.constant 0 : index
    %c0_4 = arith.constant 0 : index
    %3 = vector.load %arg3[%c0_3, %c0_4] : memref<1x128xf32, #tpu.memory_space<vmem>>, vector<1x128xf32>
    %4 = vector.broadcast %3 : vector<1x128xf32> to vector<8x128xf32>
    %5 = arith.addf %2, %4 : vector<8x128xf32>
    %cst_5 = arith.constant 0.000000e+00 : f32
    %6 = vector.broadcast %cst_5 : f32 to vector<8x128xf32>
    %7 = arith.maximumf %5, %6 : vector<8x128xf32>
    %c0_6 = arith.constant 0 : index
    %c0_7 = arith.constant 0 : index
    %8 = vector.load %arg4[%c0_6, %c0_7] : memref<8x128xf32, #tpu.memory_space<vmem>>, vector<8x128xf32>
    tpu.vector_store %arg4[%c0_6, %c0_7], %7 {strides = array<i32>} : memref<8x128xf32, #tpu.memory_space<vmem>>, vector<8x128xf32>,
    return
  }
  func.func @transform_0(%arg0: i32) -> (i32, i32) {
    %c0_i32 = arith.constant 0 : i32
    %c0_i32_0 = arith.constant 0 : i32
    return %arg0, %c0_i32 : i32, i32
  }
  func.func @transform_1(%arg0: i32) -> (i32, i32) {
    %c0_i32 = arith.constant 0 : i32
    %c0_i32_0 = arith.constant 0 : i32
    %c0_i32_1 = arith.constant 0 : i32
    return %c0_i32, %c0_i32_0 : i32, i32
  }
  func.func @transform_2(%arg0: i32) -> (i32, i32) {
    %c0_i32 = arith.constant 0 : i32
    %c0_i32_0 = arith.constant 0 : i32
    %c0_i32_1 = arith.constant 0 : i32
    return %c0_i32, %c0_i32_0 : i32, i32
  }
  func.func @transform_3(%arg0: i32) -> (i32, i32) {
    %c0_i32 = arith.constant 0 : i32
    %c0_i32_0 = arith.constant 0 : i32
    return %arg0, %c0_i32 : i32, i32
  }
}

</mosaic_0001>

<llo_original>
// kernel: mlp_extractor_apply.1
$region0: #{mlp_extractor_apply.1}
  #allocation0 [shape = 'u32[]', space=smem, size = 0x4, offset = 0x4, fixed_abs, tag = 'smem constant byte address 0x4 - core index']
  #allocation1 [shape = 'u32[144,128]{1,0:T(1,128)}', space=vmem, size = 0x12000, scoped, tag = 'internal scratch']
  %s0 = inlined_call_operand.vmem [shape: f32[8,128], index: 0, kind: input, shape index: {}]
  %s1 = inlined_call_operand.hbm [shape: f32[128,128], index: 1, kind: input, shape index: {}]
  %s2 = inlined_call_operand.vmem [shape: f32[1,128], index: 2, kind: input, shape index: {}]
  %s3 = inlined_call_operand.hbm [shape: f32[8,128], index: 3, kind: output, shape index: {}]
  %s4 = sld [smem:[#allocation0]]
  $region26: #{mlp_extractor_apply.1} parent=0
    _
  %s6 = ssub.s32 1, %s4
  %s7 = scalar_select 0, %s6, %s4
  $region1: #{mlp_extractor_apply.1} parent=0
    #allocation2 [shape = 'u8[65536]{0}', space=vmem, size = 0x10000, scoped, tag = 'input window, operand 1, single buffered']
    #allocation3 [shape = 's32[1]{0}', space=sflag, size = 0x4, scoped, tag = 'scoped memory for mlp_extractor_apply.1']
    #allocation4 [shape = 's32[1]{0}', space=sflag, size = 0x4, scoped, tag = 'scoped memory for mlp_extractor_apply.1']
    #allocation5 [shape = 'u8[4096]{0}', space=vmem, size = 0x1000, scoped, tag = 'output window, operand 0, single buffered']
    %8 = vsyncpa [#allocation3], 0
    %9 = vsyncpa [#allocation4], 0
    // Predicated region
    $region2: #{mlp_extractor_apply.1} parent=1 // pred_check
      _
    $region3: #{mlp_extractor_apply.1} parent=1 // pred_check_branch
      %11 = sbr.rel (0) target = $region5
    $region4: #{mlp_extractor_apply.1} parent=1 // pred_region
      _
    $region5: #{mlp_extractor_apply.1} parent=1 // pred_fallthru
      _
    // Predicated region
    $region6: #{mlp_extractor_apply.1} parent=1 // pred_check
      _
    $region7: #{mlp_extractor_apply.1} parent=1 // pred_check_branch
      %13 = sbr.rel (0) target = $region9
    $region8: #{mlp_extractor_apply.1} parent=1 // pred_region
      %s15 = ssub.s32 2048, 2048
      %16 = vsyncadd [#allocation3], %s15
      %s17 = sshll.u32 [#allocation2], 4
      %s18 = int_to_ptr.vmem [resolvable:$true] %s17
      %23 = dma.hbm_to_vmem [thread:$0]  %s1, 2048, %s18, [#allocation3], 128, 128, 8
    $region9: #{mlp_extractor_apply.1} parent=1 // pred_fallthru
      _
    // Predicated region
    $region10: #{mlp_extractor_apply.1} parent=1 // pred_check
      _
    $region11: #{mlp_extractor_apply.1} parent=1 // pred_check_branch
      %25 = sbr.rel (0) target = $region13
    $region12: #{mlp_extractor_apply.1} parent=1 // pred_region
      _
    $region13: #{mlp_extractor_apply.1} parent=1 // pred_fallthru
      _
    // Predicated region
    $region14: #{mlp_extractor_apply.1} parent=1 // pred_check
      _
    $region15: #{mlp_extractor_apply.1} parent=1 // pred_check_branch
      %27 = sbr.rel (0) target = $region17
    $region16: #{mlp_extractor_apply.1} parent=1 // pred_region
      %28 = dma.done [#allocation3], 2048
    $region17: #{mlp_extractor_apply.1} parent=1 // pred_fallthru
      _
    %v29 = vld [vmem:[%s0] sm:$0xff]
    %v30 = vld [vmem:[#allocation2] sm:$0xff]
    %v31 = vld [vmem:[#allocation2 + $0x8] sm:$0xff]
    %v32 = vld [vmem:[#allocation2 + $0x10] sm:$0xff]
    %v33 = vld [vmem:[#allocation2 + $0x18] sm:$0xff]
    %v34 = vld [vmem:[#allocation2 + $0x20] sm:$0xff]
    %v35 = vld [vmem:[#allocation2 + $0x28] sm:$0xff]
    %v36 = vld [vmem:[#allocation2 + $0x30] sm:$0xff]
    %v37 = vld [vmem:[#allocation2 + $0x38] sm:$0xff]
    %v38 = vld [vmem:[#allocation2 + $0x40] sm:$0xff]
    %v39 = vld [vmem:[#allocation2 + $0x48] sm:$0xff]
    %v40 = vld [vmem:[#allocation2 + $0x50] sm:$0xff]
    %v41 = vld [vmem:[#allocation2 + $0x58] sm:$0xff]
    %v42 = vld [vmem:[#allocation2 + $0x60] sm:$0xff]
    %v43 = vld [vmem:[#allocation2 + $0x68] sm:$0xff]
    %v44 = vld [vmem:[#allocation2 + $0x70] sm:$0xff]
    %v45 = vld [vmem:[#allocation2 + $0x78] sm:$0xff]
    %v46 = vld [vmem:[%s2] sm:$0x1]
    %v48 = vlaneseq
    %v49 = vshrl.u32 %v48, 7
    %v50 = vsub.s32 0, %v49
    %v51 = vrot.slane %v46, %v50
    %53 = vmatprep.subr.mxu0 0.0
    %54 = vmatpush1.msra.mxu0 %v30
    %55 = vmatprep.subr.mxu0 0.0
    %56 = vmatpush1.msra.mxu0 %v31
    %57 = vmatprep.subr.mxu0 0.0
    %58 = vmatpush1.msra.mxu0 %v32
    %59 = vmatprep.subr.mxu0 0.0
    %60 = vmatpush1.msra.mxu0 %v33
    %61 = vmatprep.subr.mxu0 0.0
    %62 = vmatpush1.msra.mxu0 %v34
    %63 = vmatprep.subr.mxu0 0.0
    %64 = vmatpush1.msra.mxu0 %v35
    %65 = vmatprep.subr.mxu0 0.0
    %66 = vmatpush1.msra.mxu0 %v36
    %67 = vmatprep.subr.mxu0 0.0
    %68 = vmatpush1.msra.mxu0 %v37
    %69 = vmatprep.subr.mxu0 0.0
    %70 = vmatpush1.msra.mxu0 %v38
    %71 = vmatprep.subr.mxu0 0.0
    %72 = vmatpush1.msra.mxu0 %v39
    %73 = vmatprep.subr.mxu0 0.0
    %74 = vmatpush1.msra.mxu0 %v40
    %75 = vmatprep.subr.mxu0 0.0
    %76 = vmatpush1.msra.mxu0 %v41
    %77 = vmatprep.subr.mxu0 0.0
    %78 = vmatpush1.msra.mxu0 %v42
    %79 = vmatprep.subr.mxu0 0.0
    %80 = vmatpush1.msra.mxu0 %v43
    %81 = vmatprep.subr.mxu0 0.0
    %82 = vmatpush1.msra.mxu0 %v44
    %83 = vmatprep.subr.mxu0 0.0
    %84 = vmatpush1.msra.mxu0 %v45
    %85 = vmatprep.subr.mxu0 0.0
    %86 = vmatpush1.msra.mxu0 0.0
    %87 = vmatprep.subr.mxu0 0.0
    %88 = vmatpush1.msra.mxu0 0.0
    %89 = vmatprep.subr.mxu0 0.0
    %90 = vmatpush1.msra.mxu0 0.0
    %91 = vmatprep.subr.mxu0 0.0
    %92 = vmatpush1.msra.mxu0 0.0
    %93 = vmatprep.subr.mxu0 0.0
    %94 = vmatpush1.msra.mxu0 0.0
    %95 = vmatprep.subr.mxu0 0.0
    %96 = vmatpush1.msra.mxu0 0.0
    %97 = vmatprep.subr.mxu0 0.0
    %98 = vmatpush1.msra.mxu0 0.0
    %99 = vmatprep.subr.mxu0 0.0
    %100 = vmatpush1.msra.mxu0 0.0
    %101 = vmatprep.subr.mxu0 0.0
    %102 = vmatpush1.msra.mxu0 0.0
    %103 = vmatprep.subr.mxu0 0.0
    %104 = vmatpush1.msra.mxu0 0.0
    %105 = vmatprep.subr.mxu0 0.0
    %106 = vmatpush1.msra.mxu0 0.0
    %107 = vmatprep.subr.mxu0 0.0
    %108 = vmatpush1.msra.mxu0 0.0
    %109 = vmatprep.subr.mxu0 0.0
    %110 = vmatpush1.msra.mxu0 0.0
    %111 = vmatprep.subr.mxu0 0.0
    %112 = vmatpush1.msra.mxu0 0.0
    %113 = vmatprep.subr.mxu0 0.0
    %114 = vmatpush1.msra.mxu0 0.0
    %115 = vmatprep.subr.mxu0 0.0
    %116 = vmatpush1.msra.mxu0 0.0
    %117 = vmatprep.mubr.f32.mxu0 0.0
    %118 = vmatmul.mubr.f32.gmra.mrb[0].mxu0 %v29
    %v119 = vpop.f32.mrb[0].mxu0
    %v120 = vadd.f32 %v51, %v119
    %v121 = vpop.f32.mrb[0].mxu0
    %122 = vdwg.mxu0
    %v123 = vmax.f32 %v120, 0.0
    %124 = vst [vmem:[#allocation5] sm:$0xff] %v123
    // Predicated region
    $region18: #{mlp_extractor_apply.1} parent=1 // pred_check
      _
    $region19: #{mlp_extractor_apply.1} parent=1 // pred_check_branch
      %126 = sbr.rel (0) target = $region21
    $region20: #{mlp_extractor_apply.1} parent=1 // pred_region
      %s128 = ssub.s32 128, 128
      %129 = vsyncadd [#allocation4], %s128
      %s131 = sshll.u32 [#allocation5], 4
      %s132 = int_to_ptr.vmem [resolvable:$true] %s131
      %134 = dma.vmem_to_hbm [thread:$0]  %s132, 128, %s3, [#allocation4]
    $region21: #{mlp_extractor_apply.1} parent=1 // pred_fallthru
      _
    // Predicated region
    $region22: #{mlp_extractor_apply.1} parent=1 // pred_check
      _
    $region23: #{mlp_extractor_apply.1} parent=1 // pred_check_branch
      %136 = sbr.rel (0) target = $region25
    $region24: #{mlp_extractor_apply.1} parent=1 // pred_region
      %137 = dma.done [#allocation4], 128
    $region25: #{mlp_extractor_apply.1} parent=1 // pred_fallthru
      _
    %138 = vsyncpa [#allocation3], 1
    %139 = vsyncpa [#allocation4], 1

</llo_original>
